<compile_context>
chip_gen: v6e
topology: v6e:2x2x1
jax: 0.10.0
libtpu: 0.0.40
codegen_flags: <defaults>
</compile_context>

<pallas_src>
import functools

import jax
import jax.numpy as jnp
from jax.experimental import pallas as pl
from jax.experimental.pallas import tpu as pltpu


def _mad_kernel(x1_ref, x0_ref, *refs, num_layers, return_softmin,
                compute_dtype, approx_reciprocal):
    *wb_refs, o_ref = refs
    R, S, E = x0_ref.shape
    cd = compute_dtype

    # ---- layer 1, split across the [x1 | x0] feature concat ----------------
    w1a = wb_refs[0][...]                       # (E, d1)  compute dtype
    w1b = wb_refs[1][...]                       # (E, d1)  compute dtype
    b1 = wb_refs[2][...]                        # (1, d1)  f32

    # Per-(B,H)-group half: computed once per group, broadcast over samples.
    h1 = jnp.dot(x1_ref[...].astype(cd), w1a,
                 preferred_element_type=jnp.float32) + b1           # (R, d1)
    # Per-sample half.
    x0_2d = x0_ref[...].reshape(R * S, E).astype(cd)
    h0 = jnp.dot(x0_2d, w1b, preferred_element_type=jnp.float32)    # (R*S, d1)
    d1 = h0.shape[-1]
    h = h0.reshape(R, S, d1) + h1[:, None, :]                       # (R, S, d1)

    if num_layers == 1:
        logits = h                                                  # (R, S, 1)
    else:
        # ReLU (dropout = identity in eval mode).
        h = jnp.maximum(h, 0.0).reshape(R * S, d1)
        idx = 3
        for _ in range(num_layers - 2):                             # middle layers
            w = wb_refs[idx][...]                                   # (Hd, Hd) compute dtype
            b = wb_refs[idx + 1][...]                               # (1, Hd)  f32
            idx += 2
            h = jnp.dot(h.astype(cd), w,
                        preferred_element_type=jnp.float32) + b
            h = jnp.maximum(h, 0.0)
        # Last layer (out_channels == 1): VPU multiply + lane reduction
        # instead of an MXU pass that would produce a single output column.
        w_last = wb_refs[idx][...]                                  # (1, Hd) f32
        b_last = wb_refs[idx + 1][...]                              # (1, 1)  f32
        logits = jnp.sum(h * w_last, axis=-1, keepdims=True) + b_last  # (R*S, 1)
        logits = logits.reshape(R, S, 1)

    if return_softmin:
        # softmin over the samples axis == softmax(-logits), max-subtracted.
        neg = -logits
        m = jnp.max(neg, axis=1, keepdims=True)                     # (R, 1, 1)
        e = jnp.exp(neg - m)
        denom = jnp.sum(e, axis=1, keepdims=True)                   # (R, 1, 1)
        out = e * pl.reciprocal(denom, approx=approx_reciprocal)
    else:
        out = jax.nn.sigmoid(logits)

    o_ref[...] = out.reshape(R * S, 1).astype(o_ref.dtype)


def _choose_row_block(bh, s, target_sample_rows):
    """Number of (B, H) groups per grid step.

    Returns either bh itself (full-extent blocks, always layout-legal) or a
    multiple of 8 that divides bh, targeting ~target_sample_rows MLP rows per
    step so the MXU M dimension is well filled without stressing VMEM.
    """
    if bh * s <= target_sample_rows:
        return bh
    divisors = [r for r in range(8, bh, 8) if bh % r == 0]
    fitting = [r for r in divisors if r * s <= target_sample_rows]
    if fitting:
        return max(fitting)
    if divisors:
        return min(divisors)
    return bh


def mad_attention_forward(x1, x0, weights, biases, *, return_softmin=True,
                          compute_dtype=jnp.bfloat16, approx_reciprocal=True,
                          target_sample_rows=512):
    B, H, E = x1.shape
    S = x0.shape[2]
    BH = B * H
    num_layers = len(weights)
    out_channels = weights[-1].shape[1]
    assert out_channels == 1, "squeeze(3) in the reference implies out_channels == 1"
    assert weights[0].shape[0] == 2 * E

    cd = compute_dtype
    x1f = x1.reshape(BH, E).astype(cd)
    x0f = x0.reshape(BH, S, E).astype(cd)

    # Split the first-layer weight so the [x1 | x0] concat never hits HBM.
    w1a = weights[0][:E].astype(cd)                       # applied to x1
    w1b = weights[0][E:].astype(cd)                       # applied to x0
    b1 = biases[0].reshape(1, -1).astype(jnp.float32)
    wb = [w1a, w1b, b1]
    for l in range(1, num_layers - 1):
        wb.append(weights[l].astype(cd))
        wb.append(biases[l].reshape(1, -1).astype(jnp.float32))
    if num_layers > 1:
        wb.append(weights[-1].reshape(1, -1).astype(jnp.float32))   # (1, hidden) == w_last^T
        wb.append(biases[-1].reshape(1, 1).astype(jnp.float32))     # (1, 1)

    R = _choose_row_block(BH, S, target_sample_rows)
    grid = (BH // R,)

    # Constant block index -> Pallas DMAs the weights once and keeps them
    # resident in VMEM across grid steps (all wb entries are 2D).
    wb_specs = [pl.BlockSpec(a.shape, lambda i: (0, 0)) for a in wb]

    kernel = functools.partial(
        _mad_kernel, num_layers=num_layers, return_softmin=return_softmin,
        compute_dtype=cd, approx_reciprocal=approx_reciprocal)

    out = pl.pallas_call(
        kernel,
        out_shape=jax.ShapeDtypeStruct((BH * S, 1), jnp.float32),
        grid_spec=pltpu.PrefetchScalarGridSpec(
            num_scalar_prefetch=0,
            grid=grid,
            in_specs=[pl.BlockSpec((R, E), lambda i: (i, 0)),
                      pl.BlockSpec((R, S, E), lambda i: (i, 0, 0))] + wb_specs,
            out_specs=pl.BlockSpec((R * S, 1), lambda i: (i, 0)),
        ),
        compiler_params=pltpu.CompilerParams(
            dimension_semantics=("parallel",)),
    )(x1f, x0f, *wb)

    return out.reshape(B, H, S)


def mad_reference(x1, x0, weights, biases, return_softmin=True):
    """Pure-JAX reference mirroring the PyTorch forward (eval mode)."""
    B, H, E = x1.shape
    S = x0.shape[2]
    x1_exp = jnp.broadcast_to(x1[:, :, None, :], (B, H, S, E))
    x = jnp.concatenate([x1_exp, x0], axis=3)
    for i, (w, b) in enumerate(zip(weights, biases)):
        x = x @ w + b
        if i < len(weights) - 1:
            x = jax.nn.relu(x)
    x = x[..., 0]
    if return_softmin:
        return jax.nn.softmax(-x, axis=2)
    return jax.nn.sigmoid(x)


def init_mad_params(key, embedding_dim, hidden_channels, out_channels, num_layers):
    """Deterministic nn.Linear-style init (uniform +/- 1/sqrt(fan_in))."""
    if num_layers == 1:
        dims = [(2 * embedding_dim, out_channels)]
    else:
        dims = [(2 * embedding_dim, hidden_channels)]
        for _ in range(num_layers - 2):
            dims.append((hidden_channels, hidden_channels))
        dims.append((hidden_channels, out_channels))
    weights, biases = [], []
    for (fan_in, fan_out) in dims:
        key, kw, kb = jax.random.split(key, 3)
        bound = 1.0 / (fan_in ** 0.5)
        weights.append(jax.random.uniform(kw, (fan_in, fan_out), jnp.float32,
                                          -bound, bound))
        biases.append(jax.random.uniform(kb, (fan_out,), jnp.float32,
                                         -bound, bound))
    return weights, biases


if __name__ == "__main__":
    # small shapes: batch=2, heads=4, samples=8, embedding=16, hidden=32
    B, H, S, E = 2, 4, 8, 16
    hidden_channels, out_channels, num_layers = 32, 1, 3

    key = jax.random.PRNGKey(0)
    k1, k0, kp = jax.random.split(key, 3)
    x1 = jax.random.normal(k1, (B, H, E), jnp.float32)
    x0 = jax.random.normal(k0, (B, H, S, E), jnp.float32)
    weights, biases = init_mad_params(kp, E, hidden_channels, out_channels,
                                      num_layers)

    ref = mad_reference(x1, x0, weights, biases, return_softmin=True)

    # 1) exactness check: f32 matmuls, exact reciprocal.
    out_f32 = mad_attention_forward(
        x1, x0, weights, biases, return_softmin=True,
        compute_dtype=jnp.float32, approx_reciprocal=False)
    out_f32 = jax.block_until_ready(out_f32)
    assert out_f32.shape == (B, H, S)
    assert jnp.allclose(out_f32, ref, atol=1e-4, rtol=1e-4), "f32 mismatch vs reference"

    # 2) performance path: bf16 matmul inputs (f32 accumulation) + approx recip.
    out_bf16 = mad_attention_forward(
        x1, x0, weights, biases, return_softmin=True,
        compute_dtype=jnp.bfloat16, approx_reciprocal=True)
    out_bf16 = jax.block_until_ready(out_bf16)
    assert out_bf16.shape == (B, H, S)
    assert jnp.allclose(out_bf16, ref, atol=2e-2, rtol=2e-2), "bf16 mismatch vs reference"

    print("KERNEL_OK")
</pallas_src>

<mosaic_0001>
module attributes {stable_mosaic.version = 11 : i64} {
  func.func @_mad_kernel(%arg0: i32, %arg1: memref<8x16xf32, #tpu.memory_space<vmem>>, %arg2: memref<8x8x16xf32, #tpu.memory_space<vmem>>, %arg3: memref<16x32xf32, #tpu.memory_space<vmem>>, %arg4: memref<16x32xf32, #tpu.memory_space<vmem>>, %arg5: memref<1x32xf32, #tpu.memory_space<vmem>>, %arg6: memref<32x32xf32, #tpu.memory_space<vmem>>, %arg7: memref<1x32xf32, #tpu.memory_space<vmem>>, %arg8: memref<1x32xf32, #tpu.memory_space<vmem>>, %arg9: memref<1x1xf32, #tpu.memory_space<vmem>>, %arg10: memref<64x1xf32, #tpu.memory_space<vmem>>) attributes {dimension_semantics = [#tpu.dimension_semantics<parallel>], iteration_bounds = array<i64: 1>, scalar_prefetch = 0 : i64, scratch_operands = 0 : i64, tpu.core_type = #tpu.core_type<tc>, window_params = [{transform_indices = @transform_0, window_bounds = array<i64: 8, 16>}, {transform_indices = @transform_1, window_bounds = array<i64: 8, 8, 16>}, {pipeline_mode = #tpu.pipeline_mode<synchronous>, transform_indices = @transform_2, window_bounds = array<i64: 16, 32>}, {pipeline_mode = #tpu.pipeline_mode<synchronous>, transform_indices = @transform_3, window_bounds = array<i64: 16, 32>}, {pipeline_mode = #tpu.pipeline_mode<synchronous>, transform_indices = @transform_4, window_bounds = array<i64: 1, 32>}, {pipeline_mode = #tpu.pipeline_mode<synchronous>, transform_indices = @transform_5, window_bounds = array<i64: 32, 32>}, {pipeline_mode = #tpu.pipeline_mode<synchronous>, transform_indices = @transform_6, window_bounds = array<i64: 1, 32>}, {pipeline_mode = #tpu.pipeline_mode<synchronous>, transform_indices = @transform_7, window_bounds = array<i64: 1, 32>}, {pipeline_mode = #tpu.pipeline_mode<synchronous>, transform_indices = @transform_8, window_bounds = array<i64: 1, 1>}, {transform_indices = @transform_9, window_bounds = array<i64: 64, 1>}]} {
    %c0 = arith.constant 0 : index
    %c0_0 = arith.constant 0 : index
    %0 = vector.load %arg3[%c0, %c0_0] : memref<16x32xf32, #tpu.memory_space<vmem>>, vector<16x32xf32>
    %c0_1 = arith.constant 0 : index
    %c0_2 = arith.constant 0 : index
    %1 = vector.load %arg4[%c0_1, %c0_2] : memref<16x32xf32, #tpu.memory_space<vmem>>, vector<16x32xf32>
    %c0_3 = arith.constant 0 : index
    %c0_4 = arith.constant 0 : index
    %2 = vector.load %arg5[%c0_3, %c0_4] : memref<1x32xf32, #tpu.memory_space<vmem>>, vector<1x32xf32>
    %c0_5 = arith.constant 0 : index
    %c0_6 = arith.constant 0 : index
    %3 = vector.load %arg1[%c0_5, %c0_6] : memref<8x16xf32, #tpu.memory_space<vmem>>, vector<8x16xf32>
    %cst = arith.constant dense<0.000000e+00> : vector<8x32xf32>
    %4 = tpu.matmul %3, %0, %cst {dimension_numbers = #tpu.dot_dimension_numbers<[1], [0], [0], [1], [0, 0, 1, 1], [], []>} : vector<8x16xf32>, vector<16x32xf32>, vector<8x32xf32> -> vector<8x32xf32>
    %5 = vector.broadcast %2 : vector<1x32xf32> to vector<8x32xf32>
    %6 = arith.addf %4, %5 : vector<8x32xf32>
    %c0_7 = arith.constant 0 : index
    %c0_8 = arith.constant 0 : index
    %c0_9 = arith.constant 0 : index
    %7 = vector.load %arg2[%c0_7, %c0_8, %c0_9] : memref<8x8x16xf32, #tpu.memory_space<vmem>>, vector<8x8x16xf32>
    %8 = vector.shape_cast %7 : vector<8x8x16xf32> to vector<64x16xf32>
    %cst_10 = arith.constant dense<0.000000e+00> : vector<64x32xf32>
    %9 = tpu.matmul %8, %1, %cst_10 {dimension_numbers = #tpu.dot_dimension_numbers<[1], [0], [0], [1], [0, 0, 1, 1], [], []>} : vector<64x16xf32>, vector<16x32xf32>, vector<64x32xf32> -> vector<64x32xf32>
    %10 = vector.shape_cast %9 : vector<64x32xf32> to vector<8x8x32xf32>
    %11 = vector.shape_cast %6 : vector<8x32xf32> to vector<8x1x32xf32>
    %12 = vector.broadcast %11 : vector<8x1x32xf32> to vector<8x8x32xf32>
    %13 = arith.addf %10, %12 : vector<8x8x32xf32>
    %cst_11 = arith.constant 0.000000e+00 : f32
    %14 = vector.broadcast %cst_11 : f32 to vector<8x8x32xf32>
    %15 = arith.maximumf %13, %14 : vector<8x8x32xf32>
    %16 = vector.shape_cast %15 : vector<8x8x32xf32> to vector<64x32xf32>
    %c0_12 = arith.constant 0 : index
    %c0_13 = arith.constant 0 : index
    %17 = vector.load %arg6[%c0_12, %c0_13] : memref<32x32xf32, #tpu.memory_space<vmem>>, vector<32x32xf32>
    %c0_14 = arith.constant 0 : index
    %c0_15 = arith.constant 0 : index
    %18 = vector.load %arg7[%c0_14, %c0_15] : memref<1x32xf32, #tpu.memory_space<vmem>>, vector<1x32xf32>
    %cst_16 = arith.constant dense<0.000000e+00> : vector<64x32xf32>
    %19 = tpu.matmul %16, %17, %cst_16 {dimension_numbers = #tpu.dot_dimension_numbers<[1], [0], [0], [1], [0, 0, 1, 1], [], []>} : vector<64x32xf32>, vector<32x32xf32>, vector<64x32xf32> -> vector<64x32xf32>
    %20 = vector.broadcast %18 : vector<1x32xf32> to vector<64x32xf32>
    %21 = arith.addf %19, %20 : vector<64x32xf32>
    %cst_17 = arith.constant 0.000000e+00 : f32
    %22 = vector.broadcast %cst_17 : f32 to vector<64x32xf32>
    %23 = arith.maximumf %21, %22 : vector<64x32xf32>
    %c0_18 = arith.constant 0 : index
    %c0_19 = arith.constant 0 : index
    %24 = vector.load %arg8[%c0_18, %c0_19] : memref<1x32xf32, #tpu.memory_space<vmem>>, vector<1x32xf32>
    %c0_20 = arith.constant 0 : index
    %c0_21 = arith.constant 0 : index
    %25 = vector.load %arg9[%c0_20, %c0_21] : memref<1x1xf32, #tpu.memory_space<vmem>>, vector<1x1xf32>
    %26 = vector.broadcast %24 : vector<1x32xf32> to vector<64x32xf32>
    %27 = arith.mulf %23, %26 : vector<64x32xf32>
    %cst_22 = arith.constant dense<0.000000e+00> : vector<64xf32>
    %28 = vector.multi_reduction <add>, %27, %cst_22 [1] : vector<64x32xf32> to vector<64xf32>
    %29 = vector.shape_cast %28 : vector<64xf32> to vector<64x1xf32>
    %30 = vector.broadcast %25 : vector<1x1xf32> to vector<64x1xf32>
    %31 = arith.addf %29, %30 : vector<64x1xf32>
    %32 = vector.shape_cast %31 : vector<64x1xf32> to vector<8x8x1xf32>
    %cst_23 = arith.constant 0.000000e+00 : f32
    %33 = vector.broadcast %cst_23 : f32 to vector<8x8x1xf32>
    %34 = arith.subf %33, %32 : vector<8x8x1xf32>
    %cst_24 = arith.constant dense<0xFF800000> : vector<8x1xf32>
    %35 = vector.multi_reduction <maximumf>, %34, %cst_24 [1] : vector<8x8x1xf32> to vector<8x1xf32>
    %36 = vector.shape_cast %35 : vector<8x1xf32> to vector<8x1x1xf32>
    %37 = vector.broadcast %36 : vector<8x1x1xf32> to vector<8x8x1xf32>
    %38 = arith.subf %34, %37 : vector<8x8x1xf32>
    %39 = math.exp %38 : vector<8x8x1xf32>
    %cst_25 = arith.constant dense<0.000000e+00> : vector<8x1xf32>
    %40 = vector.multi_reduction <add>, %39, %cst_25 [1] : vector<8x8x1xf32> to vector<8x1xf32>
    %41 = vector.shape_cast %40 : vector<8x1xf32> to vector<8x1x1xf32>
    %42 = tpu.reciprocal %41 : vector<8x1x1xf32> -> vector<8x1x1xf32>
    %43 = vector.broadcast %42 : vector<8x1x1xf32> to vector<8x8x1xf32>
    %44 = arith.mulf %39, %43 : vector<8x8x1xf32>
    %45 = vector.shape_cast %44 : vector<8x8x1xf32> to vector<64x1xf32>
    %c0_26 = arith.constant 0 : index
    %c0_27 = arith.constant 0 : index
    %46 = vector.load %arg10[%c0_26, %c0_27] : memref<64x1xf32, #tpu.memory_space<vmem>>, vector<64x1xf32>
    tpu.vector_store %arg10[%c0_26, %c0_27], %45 {strides = array<i32>} : memref<64x1xf32, #tpu.memory_space<vmem>>, vector<64x1xf32>,
    return
  }
  func.func @transform_0(%arg0: i32) -> (i32, i32) {
    %c0_i32 = arith.constant 0 : i32
    %c0_i32_0 = arith.constant 0 : i32
    return %arg0, %c0_i32 : i32, i32
  }
  func.func @transform_1(%arg0: i32) -> (i32, i32, i32) {
    %c0_i32 = arith.constant 0 : i32
    %c0_i32_0 = arith.constant 0 : i32
    %c0_i32_1 = arith.constant 0 : i32
    return %arg0, %c0_i32, %c0_i32_0 : i32, i32, i32
  }
  func.func @transform_2(%arg0: i32) -> (i32, i32) {
    %c0_i32 = arith.constant 0 : i32
    %c0_i32_0 = arith.constant 0 : i32
    %c0_i32_1 = arith.constant 0 : i32
    return %c0_i32, %c0_i32_0 : i32, i32
  }
  func.func @transform_3(%arg0: i32) -> (i32, i32) {
    %c0_i32 = arith.constant 0 : i32
    %c0_i32_0 = arith.constant 0 : i32
    %c0_i32_1 = arith.constant 0 : i32
    return %c0_i32, %c0_i32_0 : i32, i32
  }
  func.func @transform_4(%arg0: i32) -> (i32, i32) {
    %c0_i32 = arith.constant 0 : i32
    %c0_i32_0 = arith.constant 0 : i32
    %c0_i32_1 = arith.constant 0 : i32
    return %c0_i32, %c0_i32_0 : i32, i32
  }
  func.func @transform_5(%arg0: i32) -> (i32, i32) {
    %c0_i32 = arith.constant 0 : i32
    %c0_i32_0 = arith.constant 0 : i32
    %c0_i32_1 = arith.constant 0 : i32
    return %c0_i32, %c0_i32_0 : i32, i32
  }
  func.func @transform_6(%arg0: i32) -> (i32, i32) {
    %c0_i32 = arith.constant 0 : i32
    %c0_i32_0 = arith.constant 0 : i32
    %c0_i32_1 = arith.constant 0 : i32
    return %c0_i32, %c0_i32_0 : i32, i32
  }
  func.func @transform_7(%arg0: i32) -> (i32, i32) {
    %c0_i32 = arith.constant 0 : i32
    %c0_i32_0 = arith.constant 0 : i32
    %c0_i32_1 = arith.constant 0 : i32
    return %c0_i32, %c0_i32_0 : i32, i32
  }
  func.func @transform_8(%arg0: i32) -> (i32, i32) {
    %c0_i32 = arith.constant 0 : i32
    %c0_i32_0 = arith.constant 0 : i32
    %c0_i32_1 = arith.constant 0 : i32
    return %c0_i32, %c0_i32_0 : i32, i32
  }
  func.func @transform_9(%arg0: i32) -> (i32, i32) {
    %c0_i32 = arith.constant 0 : i32
    %c0_i32_0 = arith.constant 0 : i32
    return %arg0, %c0_i32 : i32, i32
  }
}

</mosaic_0001>

<llo_original>
// kernel: tpu_custom_call.1
$region0: #{tpu_custom_call.1}
  #allocation0 [shape = 'u32[]', space=smem, size = 0x4, offset = 0x4, fixed_abs, tag = 'smem constant byte address 0x4 - core index']
  #allocation1 [shape = 'u32[144,128]{1,0:T(1,128)}', space=vmem, size = 0x12000, scoped, tag = 'internal scratch']
  #allocation2 [shape = 'f32[1,1]{1,0:T(1,128)S(1)}', space=vmem, size = 0x200, scoped, tag = 'scoped memory for tpu_custom_call.1']
  %s0 = inlined_call_operand.hbm [shape: f32[8,16], index: 0, kind: input, shape index: {}]
  %s1 = inlined_call_operand.hbm [shape: f32[8,8,16], index: 1, kind: input, shape index: {}]
  %s2 = inlined_call_operand.hbm [shape: f32[16,32], index: 2, kind: input, shape index: {}]
  %s3 = inlined_call_operand.hbm [shape: f32[16,32], index: 3, kind: input, shape index: {}]
  %s4 = inlined_call_operand.vmem [shape: f32[1,32], index: 4, kind: input, shape index: {}]
  %s5 = inlined_call_operand.hbm [shape: f32[32,32], index: 5, kind: input, shape index: {}]
  %s6 = inlined_call_operand.vmem [shape: f32[1,32], index: 6, kind: input, shape index: {}]
  %s7 = inlined_call_operand.vmem [shape: f32[1,32], index: 7, kind: input, shape index: {}]
  %s8 = inlined_call_operand.<no memory space> [shape: f32[1,1], index: 8, kind: input, shape index: {}]
  %s9 = inlined_call_operand.vmem [shape: f32[64,1], index: 9, kind: output, shape index: {}]
  %s10 = sld [smem:[#allocation0]]
  $region66: #{tpu_custom_call.1} parent=0
    _
  %s12 = ssub.s32 1, %s10
  %s13 = scalar_select 0, %s12, %s10
  %v14 = vstv %s8
  %15 = vst [vmem:[#allocation2] sm:$0x1] %v14
  $region1: #{tpu_custom_call.1} parent=0
    #allocation3 [shape = 'u8[4096]{0}', space=vmem, size = 0x1000, scoped, tag = 'input window, operand 0, single buffered']
    #allocation4 [shape = 's32[1]{0}', space=sflag, size = 0x4, scoped, tag = 'scoped memory for tpu_custom_call.1']
    #allocation5 [shape = 'u8[32768]{0}', space=vmem, size = 0x8000, scoped, tag = 'input window, operand 1, single buffered']
    #allocation6 [shape = 's32[1]{0}', space=sflag, size = 0x4, scoped, tag = 'scoped memory for tpu_custom_call.1']
    #allocation7 [shape = 'u8[8192]{0}', space=vmem, size = 0x2000, scoped, tag = 'input window, operand 2, single buffered']
    #allocation8 [shape = 'u8[8192]{0}', space=vmem, size = 0x2000, scoped, tag = 'input window, operand 3, single buffered']
    #allocation9 [shape = 's32[1]{0}', space=sflag, size = 0x4, scoped, tag = 'scoped memory for tpu_custom_call.1']
    #allocation10 [shape = 'u8[16384]{0}', space=vmem, size = 0x4000, scoped, tag = 'input window, operand 5, single buffered']
    %16 = vsyncpa [#allocation4], 0
    %17 = vsyncpa [#allocation6], 0
    %18 = vsyncpa [#allocation9], 0
    // Predicated region
    $region2: #{tpu_custom_call.1} parent=1 // pred_check
      _
    $region3: #{tpu_custom_call.1} parent=1 // pred_check_branch
      %20 = sbr.rel (0) target = $region5
    $region4: #{tpu_custom_call.1} parent=1 // pred_region
      %s22 = ssub.s32 128, 128
      %23 = vsyncadd [#allocation4], %s22
      %s25 = sshll.u32 [#allocation3], 4
      %s26 = int_to_ptr.vmem [resolvable:$true] %s25
      %28 = dma.hbm_to_vmem [thread:$0]  %s0, 128, %s26, [#allocation4]
    $region5: #{tpu_custom_call.1} parent=1 // pred_fallthru
      _
    // Predicated region
    $region6: #{tpu_custom_call.1} parent=1 // pred_check
      _
    $region7: #{tpu_custom_call.1} parent=1 // pred_check_branch
      %30 = sbr.rel (0) target = $region9
    $region8: #{tpu_custom_call.1} parent=1 // pred_region
      %s32 = ssub.s32 1024, 1024
      %33 = vsyncadd [#allocation6], %s32
      %s34 = sshll.u32 [#allocation5], 4
      %s35 = int_to_ptr.vmem [resolvable:$true] %s34
      %40 = dma.hbm_to_vmem [thread:$0]  %s1, 1024, %s35, [#allocation6], 128, 128, 8
    $region9: #{tpu_custom_call.1} parent=1 // pred_fallthru
      _
    // Predicated region
    $region10: #{tpu_custom_call.1} parent=1 // pred_check
      _
    $region11: #{tpu_custom_call.1} parent=1 // pred_check_branch
      %42 = sbr.rel (0) target = $region13
    $region12: #{tpu_custom_call.1} parent=1 // pred_region
      %s44 = ssub.s32 256, 256
      %45 = vsyncadd [#allocation6], %s44
      %s46 = sshll.u32 [#allocation7], 4
      %s47 = int_to_ptr.vmem [resolvable:$true] %s46
      %52 = dma.hbm_to_vmem [thread:$0]  %s2, 256, %s47, [#allocation6], 128, 128, 8
    $region13: #{tpu_custom_call.1} parent=1 // pred_fallthru
      _
    // Predicated region
    $region14: #{tpu_custom_call.1} parent=1 // pred_check
      _
    $region15: #{tpu_custom_call.1} parent=1 // pred_check_branch
      %54 = sbr.rel (0) target = $region17
    $region16: #{tpu_custom_call.1} parent=1 // pred_region
      %s56 = ssub.s32 256, 256
      %57 = vsyncadd [#allocation9], %s56
      %s58 = sshll.u32 [#allocation8], 4
      %s59 = int_to_ptr.vmem [resolvable:$true] %s58
      %64 = dma.hbm_to_vmem [thread:$0]  %s3, 256, %s59, [#allocation9], 128, 128, 8
    $region17: #{tpu_custom_call.1} parent=1 // pred_fallthru
      _
    // Predicated region
    $region18: #{tpu_custom_call.1} parent=1 // pred_check
      _
    $region19: #{tpu_custom_call.1} parent=1 // pred_check_branch
      %66 = sbr.rel (0) target = $region21
    $region20: #{tpu_custom_call.1} parent=1 // pred_region
      _
    $region21: #{tpu_custom_call.1} parent=1 // pred_fallthru
      _
    // Predicated region
    $region22: #{tpu_custom_call.1} parent=1 // pred_check
      _
    $region23: #{tpu_custom_call.1} parent=1 // pred_check_branch
      %68 = sbr.rel (0) target = $region25
    $region24: #{tpu_custom_call.1} parent=1 // pred_region
      %s70 = ssub.s32 512, 512
      %71 = vsyncadd [#allocation9], %s70
      %s72 = sshll.u32 [#allocation10], 4
      %s73 = int_to_ptr.vmem [resolvable:$true] %s72
      %78 = dma.hbm_to_vmem [thread:$0]  %s5, 512, %s73, [#allocation9], 128, 128, 8
    $region25: #{tpu_custom_call.1} parent=1 // pred_fallthru
      _
    // Predicated region
    $region26: #{tpu_custom_call.1} parent=1 // pred_check
      _
    $region27: #{tpu_custom_call.1} parent=1 // pred_check_branch
      %80 = sbr.rel (0) target = $region29
    $region28: #{tpu_custom_call.1} parent=1 // pred_region
      _
    $region29: #{tpu_custom_call.1} parent=1 // pred_fallthru
      _
    // Predicated region
    $region30: #{tpu_custom_call.1} parent=1 // pred_check
      _
    $region31: #{tpu_custom_call.1} parent=1 // pred_check_branch
      %82 = sbr.rel (0) target = $region33
    $region32: #{tpu_custom_call.1} parent=1 // pred_region
      _
    $region33: #{tpu_custom_call.1} parent=1 // pred_fallthru
      _
    // Predicated region
    $region34: #{tpu_custom_call.1} parent=1 // pred_check
      _
    $region35: #{tpu_custom_call.1} parent=1 // pred_check_branch
      %84 = sbr.rel (0) target = $region37
    $region36: #{tpu_custom_call.1} parent=1 // pred_region
      _
    $region37: #{tpu_custom_call.1} parent=1 // pred_fallthru
      _
    // Predicated region
    $region38: #{tpu_custom_call.1} parent=1 // pred_check
      _
    $region39: #{tpu_custom_call.1} parent=1 // pred_check_branch
      %86 = sbr.rel (0) target = $region41
    $region40: #{tpu_custom_call.1} parent=1 // pred_region
      %87 = dma.done [#allocation4], 128
    $region41: #{tpu_custom_call.1} parent=1 // pred_fallthru
      _
    // Predicated region
    $region42: #{tpu_custom_call.1} parent=1 // pred_check
      _
    $region43: #{tpu_custom_call.1} parent=1 // pred_check_branch
      %89 = sbr.rel (0) target = $region45
    $region44: #{tpu_custom_call.1} parent=1 // pred_region
      %90 = dma.done [#allocation6], 1024
    $region45: #{tpu_custom_call.1} parent=1 // pred_fallthru
      _
    // Predicated region
    $region46: #{tpu_custom_call.1} parent=1 // pred_check
      _
    $region47: #{tpu_custom_call.1} parent=1 // pred_check_branch
      %92 = sbr.rel (0) target = $region49
    $region48: #{tpu_custom_call.1} parent=1 // pred_region
      %93 = dma.done [#allocation6], 256
    $region49: #{tpu_custom_call.1} parent=1 // pred_fallthru
      _
    // Predicated region
    $region50: #{tpu_custom_call.1} parent=1 // pred_check
      _
    $region51: #{tpu_custom_call.1} parent=1 // pred_check_branch
      %95 = sbr.rel (0) target = $region53
    $region52: #{tpu_custom_call.1} parent=1 // pred_region
      %96 = dma.done [#allocation9], 256
    $region53: #{tpu_custom_call.1} parent=1 // pred_fallthru
      _
    // Predicated region
    $region54: #{tpu_custom_call.1} parent=1 // pred_check
      _
    $region55: #{tpu_custom_call.1} parent=1 // pred_check_branch
      %98 = sbr.rel (0) target = $region57
    $region56: #{tpu_custom_call.1} parent=1 // pred_region
      %99 = dma.done [#allocation9], 512
    $region57: #{tpu_custom_call.1} parent=1 // pred_fallthru
      _
    %v100 = vld [vmem:[#allocation7] sm:$0xff]
    %v101 = vld [vmem:[#allocation7 + $0x8] sm:$0xff]
    %v102 = vld [vmem:[#allocation8] sm:$0xff]
    %v103 = vld [vmem:[#allocation8 + $0x8] sm:$0xff]
    %v104 = vld [vmem:[%s4] sm:$0x1]
    %v105 = vld [vmem:[#allocation3] sm:$0xff]
    %v107 = vlaneseq
    %v108 = vshrl.u32 %v107, 7
    %v109 = vsub.s32 0, %v108
    %v110 = vrot.slane %v104, %v109
    %vm112 = vcmask 130048
    %v114 = vsel %vm112, %v105, 0
    %116 = vmatprep.subr.mxu0 0.0
    %117 = vmatpush1.msra.mxu0 0.0
    %118 = vmatprep.subr.mxu0 0.0
    %119 = vmatpush1.msra.mxu0 0.0
    %120 = vmatprep.subr.mxu0 0.0
    %121 = vmatpush1.msra.mxu0 0.0
    %122 = vmatprep.subr.mxu0 0.0
    %123 = vmatpush1.msra.mxu0 0.0
    %124 = vmatprep.subr.mxu0 0.0
    %125 = vmatpush1.msra.mxu0 0.0
    %126 = vmatprep.subr.mxu0 0.0
    %127 = vmatpush1.msra.mxu0 0.0
    %128 = vmatprep.subr.mxu0 0.0
    %129 = vmatpush1.msra.mxu0 0.0
    %130 = vmatprep.subr.mxu0 0.0
    %131 = vmatpush1.msra.mxu0 0.0
    %132 = vmatprep.subr.mxu0 0.0
    %133 = vmatpush1.msra.mxu0 0.0
    %134 = vmatprep.subr.mxu0 0.0
    %135 = vmatpush1.msra.mxu0 0.0
    %136 = vmatprep.subr.mxu0 0.0
    %137 = vmatpush1.msra.mxu0 0.0
    %138 = vmatprep.subr.mxu0 0.0
    %139 = vmatpush1.msra.mxu0 0.0
    %140 = vmatprep.subr.mxu0 0.0
    %141 = vmatpush1.msra.mxu0 0.0
    %142 = vmatprep.subr.mxu0 0.0
    %143 = vmatpush1.msra.mxu0 0.0
    %144 = vmatprep.subr.mxu0 0.0
    %145 = vmatpush1.msra.mxu0 %v101
    %146 = vmatprep.subr.mxu0 0.0
    %147 = vmatpush1.msra.mxu0 %v100
    %148 = vmatprep.subr.mxu0 0.0
    %149 = vmatpush2.msra.mxu0 0.0
    %150 = vmatprep.subr.mxu0 0.0
    %151 = vmatpush2.msra.mxu0 0.0
    %152 = vmatprep.subr.mxu0 0.0
    %153 = vmatpush2.msra.mxu0 0.0
    %154 = vmatprep.subr.mxu0 0.0
    %155 = vmatpush2.msra.mxu0 0.0
    %156 = vmatprep.subr.mxu0 0.0
    %157 = vmatpush2.msra.mxu0 0.0
    %158 = vmatprep.subr.mxu0 0.0
    %159 = vmatpush2.msra.mxu0 0.0
    %160 = vmatprep.subr.mxu0 0.0
    %161 = vmatpush2.msra.mxu0 0.0
    %162 = vmatprep.subr.mxu0 0.0
    %163 = vmatpush2.msra.mxu0 0.0
    %164 = vmatprep.subr.mxu0 0.0
    %165 = vmatpush2.msra.mxu0 0.0
    %166 = vmatprep.subr.mxu0 0.0
    %167 = vmatpush2.msra.mxu0 0.0
    %168 = vmatprep.subr.mxu0 0.0
    %169 = vmatpush2.msra.mxu0 0.0
    %170 = vmatprep.subr.mxu0 0.0
    %171 = vmatpush2.msra.mxu0 0.0
    %172 = vmatprep.subr.mxu0 0.0
    %173 = vmatpush2.msra.mxu0 0.0
    %174 = vmatprep.subr.mxu0 0.0
    %175 = vmatpush2.msra.mxu0 0.0
    %176 = vmatprep.subr.mxu0 0.0
    %177 = vmatpush2.msra.mxu0 0.0
    %178 = vmatprep.subr.mxu0 0.0
    %179 = vmatpush2.msra.mxu0 0.0
    %180 = vmatprep.mubr.f32.mxu0 0.0
    %181 = vmatmul.mubr.f32.gmra.mxu0 %v114
    %v182 = vpop.f32.mrf.mxu0
    %v183 = vadd.f32 %v110, %v182
    %v184 = vpop.f32.mrf.mxu0
    %185 = vdwg.mxu0
    %v186 = vld [vmem:[#allocation5] sm:$0xff]
    %v187 = vld [vmem:[#allocation5 + $0x8] sm:$0xff]
    %v188 = vld [vmem:[#allocation5 + $0x10] sm:$0xff]
    %v189 = vld [vmem:[#allocation5 + $0x18] sm:$0xff]
    %v190 = vld [vmem:[#allocation5 + $0x20] sm:$0xff]
    %v191 = vld [vmem:[#allocation5 + $0x28] sm:$0xff]
    %v192 = vld [vmem:[#allocation5 + $0x30] sm:$0xff]
    %v193 = vld [vmem:[#allocation5 + $0x38] sm:$0xff]
    %v195 = vsel %vm112, %v186, 0
    %v198 = vsel %vm112, %v187, 0
    %v201 = vsel %vm112, %v188, 0
    %v204 = vsel %vm112, %v189, 0
    %v207 = vsel %vm112, %v190, 0
    %v210 = vsel %vm112, %v191, 0
    %v213 = vsel %vm112, %v192, 0
    %v216 = vsel %vm112, %v193, 0
    %218 = vmatprep.subr.mxu0 0.0
    %219 = vmatpush1.msra.mxu0 0.0
    %220 = vmatprep.subr.mxu0 0.0
    %221 = vmatpush1.msra.mxu0 0.0
    %222 = vmatprep.subr.mxu0 0.0
    %223 = vmatpush1.msra.mxu0 0.0
    %224 = vmatprep.subr.mxu0 0.0
    %225 = vmatpush1.msra.mxu0 0.0
    %226 = vmatprep.subr.mxu0 0.0
    %227 = vmatpush1.msra.mxu0 0.0
    %228 = vmatprep.subr.mxu0 0.0
    %229 = vmatpush1.msra.mxu0 0.0
    %230 = vmatprep.subr.mxu0 0.0
    %231 = vmatpush1.msra.mxu0 0.0
    %232 = vmatprep.subr.mxu0 0.0
    %233 = vmatpush1.msra.mxu0 0.0
    %234 = vmatprep.subr.mxu0 0.0
    %235 = vmatpush1.msra.mxu0 0.0
    %236 = vmatprep.subr.mxu0 0.0
    %237 = vmatpush1.msra.mxu0 0.0
    %238 = vmatprep.subr.mxu0 0.0
    %239 = vmatpush1.msra.mxu0 0.0
    %240 = vmatprep.subr.mxu0 0.0
    %241 = vmatpush1.msra.mxu0 0.0
    %242 = vmatprep.subr.mxu0 0.0
    %243 = vmatpush1.msra.mxu0 0.0
    %244 = vmatprep.subr.mxu0 0.0
    %245 = vmatpush1.msra.mxu0 0.0
    %246 = vmatprep.subr.mxu0 0.0
    %247 = vmatpush1.msra.mxu0 %v103
    %248 = vmatprep.subr.mxu0 0.0
    %249 = vmatpush1.msra.mxu0 %v102
    %250 = vmatprep.subr.mxu0 0.0
    %251 = vmatpush2.msra.mxu0 0.0
    %252 = vmatprep.subr.mxu0 0.0
    %253 = vmatpush2.msra.mxu0 0.0
    %254 = vmatprep.subr.mxu0 0.0
    %255 = vmatpush2.msra.mxu0 0.0
    %256 = vmatprep.subr.mxu0 0.0
    %257 = vmatpush2.msra.mxu0 0.0
    %258 = vmatprep.subr.mxu0 0.0
    %259 = vmatpush2.msra.mxu0 0.0
    %260 = vmatprep.subr.mxu0 0.0
    %261 = vmatpush2.msra.mxu0 0.0
    %262 = vmatprep.subr.mxu0 0.0
    %263 = vmatpush2.msra.mxu0 0.0
    %264 = vmatprep.subr.mxu0 0.0
    %265 = vmatpush2.msra.mxu0 0.0
    %266 = vmatprep.subr.mxu0 0.0
    %267 = vmatpush2.msra.mxu0 0.0
    %268 = vmatprep.subr.mxu0 0.0
    %269 = vmatpush2.msra.mxu0 0.0
    %270 = vmatprep.subr.mxu0 0.0
    %271 = vmatpush2.msra.mxu0 0.0
    %272 = vmatprep.subr.mxu0 0.0
    %273 = vmatpush2.msra.mxu0 0.0
    %274 = vmatprep.subr.mxu0 0.0
    %275 = vmatpush2.msra.mxu0 0.0
    %276 = vmatprep.subr.mxu0 0.0
    %277 = vmatpush2.msra.mxu0 0.0
    %278 = vmatprep.subr.mxu0 0.0
    %279 = vmatpush2.msra.mxu0 0.0
    %280 = vmatprep.subr.mxu0 0.0
    %281 = vmatpush2.msra.mxu0 0.0
    %282 = vmatprep.mubr.f32.mxu0 0.0
    %283 = vmatmul.mubr.f32.gmra.mxu0 %v195
    %v284 = vpop.f32.mrf.mxu0
    %v285 = vadd.f32 0.0, %v284
    %v286 = vpop.f32.mrf.mxu0
    %287 = vmatprep.mubr.f32.mxu0 0.0
    %288 = vmatmul.mubr.f32.gmra.mxu0 %v198
    %v289 = vpop.f32.mrf.mxu0
    %v290 = vadd.f32 0.0, %v289
    %v291 = vpop.f32.mrf.mxu0
    %292 = vmatprep.mubr.f32.mxu0 0.0
    %293 = vmatmul.mubr.f32.gmra.mxu0 %v201
    %v294 = vpop.f32.mrf.mxu0
    %v295 = vadd.f32 0.0, %v294
    %v296 = vpop.f32.mrf.mxu0
    %297 = vmatprep.mubr.f32.mxu0 0.0
    %298 = vmatmul.mubr.f32.gmra.mxu0 %v204
    %v299 = vpop.f32.mrf.mxu0
    %v300 = vadd.f32 0.0, %v299
    %v301 = vpop.f32.mrf.mxu0
    %302 = vmatprep.mubr.f32.mxu0 0.0
    %303 = vmatmul.mubr.f32.gmra.mxu0 %v207
    %v304 = vpop.f32.mrf.mxu0
    %v305 = vadd.f32 0.0, %v304
    %v306 = vpop.f32.mrf.mxu0
    %307 = vmatprep.mubr.f32.mxu0 0.0
    %308 = vmatmul.mubr.f32.gmra.mxu0 %v210
    %v309 = vpop.f32.mrf.mxu0
    %v310 = vadd.f32 0.0, %v309
    %v311 = vpop.f32.mrf.mxu0
    %312 = vmatprep.mubr.f32.mxu0 0.0
    %313 = vmatmul.mubr.f32.gmra.mxu0 %v213
    %v314 = vpop.f32.mrf.mxu0
    %v315 = vadd.f32 0.0, %v314
    %v316 = vpop.f32.mrf.mxu0
    %317 = vmatprep.mubr.f32.mxu0 0.0
    %318 = vmatmul.mubr.f32.gmra.mxu0 %v216
    %v319 = vpop.f32.mrf.mxu0
    %v320 = vadd.f32 0.0, %v319
    %v321 = vpop.f32.mrf.mxu0
    %322 = vdwg.mxu0
    %v324 = vcombine.high %v183, %v183
    %v326 = vunpack.c.l.s4 1966171168
    %v327 = vunpack.c.0.s8 %v326
    %v328 = vlaneseq
    %v329 = vshrl.u32 %v328, 7
    %v330 = vsub.s32 %v327, %v329
    %v331 = vrot.slane %v183, %v330
    %v333 = vunpack.c.l.s4 1966171168
    %v334 = vunpack.c.0.s8 %v333
    %v335 = vlaneseq
    %v336 = vshrl.u32 %v335, 7
    %v337 = vsub.s32 %v334, %v336
    %v338 = vrot.slane %v324, %v337
    %v339 = vcombine.high %v331, %v331
    %v340 = vcombine.high %v338, %v338
    %v342 = vunpack.c.l.s4 1966171168
    %v343 = vunpack.c.0.s8 %v342
    %v344 = vlaneseq
    %v345 = vshrl.u32 %v344, 7
    %v346 = vsub.s32 %v343, %v345
    %v347 = vrot.slane %v331, %v346
    %v349 = vunpack.c.l.s4 1966171168
    %v350 = vunpack.c.0.s8 %v349
    %v351 = vlaneseq
    %v352 = vshrl.u32 %v351, 7
    %v353 = vsub.s32 %v350, %v352
    %v354 = vrot.slane %v338, %v353
    %v356 = vunpack.c.l.s4 1966171168
    %v357 = vunpack.c.0.s8 %v356
    %v358 = vlaneseq
    %v359 = vshrl.u32 %v358, 7
    %v360 = vsub.s32 %v357, %v359
    %v361 = vrot.slane %v339, %v360
    %v363 = vunpack.c.l.s4 1966171168
    %v364 = vunpack.c.0.s8 %v363
    %v365 = vlaneseq
    %v366 = vshrl.u32 %v365, 7
    %v367 = vsub.s32 %v364, %v366
    %v368 = vrot.slane %v340, %v367
    %v369 = vcombine.high %v347, %v347
    %v370 = vcombine.high %v354, %v354
    %v371 = vcombine.high %v361, %v361
    %v372 = vcombine.high %v368, %v368
    %v373 = vlaneseq
    %v374 = vshrl.u32 %v373, 7
    %v375 = vsub.s32 0, %v374
    %v376 = vrot.slane %v347, %v375
    %v377 = vlaneseq
    %v378 = vshrl.u32 %v377, 7
    %v379 = vsub.s32 0, %v378
    %v380 = vrot.slane %v361, %v379
    %v381 = vlaneseq
    %v382 = vshrl.u32 %v381, 7
    %v383 = vsub.s32 0, %v382
    %v384 = vrot.slane %v369, %v383
    %v385 = vlaneseq
    %v386 = vshrl.u32 %v385, 7
    %v387 = vsub.s32 0, %v386
    %v388 = vrot.slane %v371, %v387
    %v389 = vlaneseq
    %v390 = vshrl.u32 %v389, 7
    %v391 = vsub.s32 0, %v390
    %v392 = vrot.slane %v354, %v391
    %v393 = vlaneseq
    %v394 = vshrl.u32 %v393, 7
    %v395 = vsub.s32 0, %v394
    %v396 = vrot.slane %v368, %v395
    %v397 = vlaneseq
    %v398 = vshrl.u32 %v397, 7
    %v399 = vsub.s32 0, %v398
    %v400 = vrot.slane %v370, %v399
    %v401 = vlaneseq
    %v402 = vshrl.u32 %v401, 7
    %v403 = vsub.s32 0, %v402
    %v404 = vrot.slane %v372, %v403
    %v413 = vadd.f32 %v285, %v376
    %v414 = vadd.f32 %v290, %v380
    %v415 = vadd.f32 %v295, %v384
    %v416 = vadd.f32 %v300, %v388
    %v417 = vadd.f32 %v305, %v392
    %v418 = vadd.f32 %v310, %v396
    %v419 = vadd.f32 %v315, %v400
    %v420 = vadd.f32 %v320, %v404
    %v421 = vmax.f32 %v413, 0.0
    %v422 = vmax.f32 %v414, 0.0
    %v423 = vmax.f32 %v415, 0.0
    %v424 = vmax.f32 %v416, 0.0
    %v425 = vmax.f32 %v417, 0.0
    %v426 = vmax.f32 %v418, 0.0
    %v427 = vmax.f32 %v419, 0.0
    %v428 = vmax.f32 %v420, 0.0
    %v429 = vld [vmem:[#allocation10] sm:$0xff]
    %v430 = vld [vmem:[#allocation10 + $0x8] sm:$0xff]
    %v431 = vld [vmem:[#allocation10 + $0x10] sm:$0xff]
    %v432 = vld [vmem:[#allocation10 + $0x18] sm:$0xff]
    %v433 = vld [vmem:[%s6] sm:$0x1]
    %v435 = vlaneseq
    %v436 = vshrl.u32 %v435, 7
    %v437 = vsub.s32 0, %v436
    %v438 = vrot.slane %v433, %v437
    %vm440 = vcmask 261120
    %v442 = vsel %vm440, %v421, 0
    %v445 = vsel %vm440, %v422, 0
    %v448 = vsel %vm440, %v423, 0
    %v451 = vsel %vm440, %v424, 0
    %v454 = vsel %vm440, %v425, 0
    %v457 = vsel %vm440, %v426, 0
    %v460 = vsel %vm440, %v427, 0
    %v463 = vsel %vm440, %v428, 0
    %465 = vmatprep.subr.mxu0 0.0
    %466 = vmatpush1.msra.mxu0 0.0
    %467 = vmatprep.subr.mxu0 0.0
    %468 = vmatpush1.msra.mxu0 0.0
    %469 = vmatprep.subr.mxu0 0.0
    %470 = vmatpush1.msra.mxu0 0.0
    %471 = vmatprep.subr.mxu0 0.0
    %472 = vmatpush1.msra.mxu0 0.0
    %473 = vmatprep.subr.mxu0 0.0
    %474 = vmatpush1.msra.mxu0 0.0
    %475 = vmatprep.subr.mxu0 0.0
    %476 = vmatpush1.msra.mxu0 0.0
    %477 = vmatprep.subr.mxu0 0.0
    %478 = vmatpush1.msra.mxu0 0.0
    %479 = vmatprep.subr.mxu0 0.0
    %480 = vmatpush1.msra.mxu0 0.0
    %481 = vmatprep.subr.mxu0 0.0
    %482 = vmatpush1.msra.mxu0 0.0
    %483 = vmatprep.subr.mxu0 0.0
    %484 = vmatpush1.msra.mxu0 0.0
    %485 = vmatprep.subr.mxu0 0.0
    %486 = vmatpush1.msra.mxu0 0.0
    %487 = vmatprep.subr.mxu0 0.0
    %488 = vmatpush1.msra.mxu0 0.0
    %489 = vmatprep.subr.mxu0 0.0
    %490 = vmatpush1.msra.mxu0 %v432
    %491 = vmatprep.subr.mxu0 0.0
    %492 = vmatpush1.msra.mxu0 %v431
    %493 = vmatprep.subr.mxu0 0.0
    %494 = vmatpush1.msra.mxu0 %v430
    %495 = vmatprep.subr.mxu0 0.0
    %496 = vmatpush1.msra.mxu0 %v429
    %497 = vmatprep.subr.mxu0 0.0
    %498 = vmatpush2.msra.mxu0 0.0
    %499 = vmatprep.subr.mxu0 0.0
    %500 = vmatpush2.msra.mxu0 0.0
    %501 = vmatprep.subr.mxu0 0.0
    %502 = vmatpush2.msra.mxu0 0.0
    %503 = vmatprep.subr.mxu0 0.0
    %504 = vmatpush2.msra.mxu0 0.0
    %505 = vmatprep.subr.mxu0 0.0
    %506 = vmatpush2.msra.mxu0 0.0
    %507 = vmatprep.subr.mxu0 0.0
    %508 = vmatpush2.msra.mxu0 0.0
    %509 = vmatprep.subr.mxu0 0.0
    %510 = vmatpush2.msra.mxu0 0.0
    %511 = vmatprep.subr.mxu0 0.0
    %512 = vmatpush2.msra.mxu0 0.0
    %513 = vmatprep.subr.mxu0 0.0
    %514 = vmatpush2.msra.mxu0 0.0
    %515 = vmatprep.subr.mxu0 0.0
    %516 = vmatpush2.msra.mxu0 0.0
    %517 = vmatprep.subr.mxu0 0.0
    %518 = vmatpush2.msra.mxu0 0.0
    %519 = vmatprep.subr.mxu0 0.0
    %520 = vmatpush2.msra.mxu0 0.0
    %521 = vmatprep.subr.mxu0 0.0
    %522 = vmatpush2.msra.mxu0 0.0
    %523 = vmatprep.subr.mxu0 0.0
    %524 = vmatpush2.msra.mxu0 0.0
    %525 = vmatprep.subr.mxu0 0.0
    %526 = vmatpush2.msra.mxu0 0.0
    %527 = vmatprep.subr.mxu0 0.0
    %528 = vmatpush2.msra.mxu0 0.0
    %529 = vmatprep.mubr.f32.mxu0 0.0
    %530 = vmatmul.mubr.f32.gmra.mxu0 %v442
    %v531 = vpop.f32.mrf.mxu0
    %v532 = vadd.f32 %v438, %v531
    %v533 = vpop.f32.mrf.mxu0
    %534 = vmatprep.mubr.f32.mxu0 0.0
    %535 = vmatmul.mubr.f32.gmra.mxu0 %v445
    %v536 = vpop.f32.mrf.mxu0
    %v537 = vadd.f32 %v438, %v536
    %v538 = vpop.f32.mrf.mxu0
    %539 = vmatprep.mubr.f32.mxu0 0.0
    %540 = vmatmul.mubr.f32.gmra.mxu0 %v448
    %v541 = vpop.f32.mrf.mxu0
    %v542 = vadd.f32 %v438, %v541
    %v543 = vpop.f32.mrf.mxu0
    %544 = vmatprep.mubr.f32.mxu0 0.0
    %545 = vmatmul.mubr.f32.gmra.mxu0 %v451
    %v546 = vpop.f32.mrf.mxu0
    %v547 = vadd.f32 %v438, %v546
    %v548 = vpop.f32.mrf.mxu0
    %549 = vmatprep.mubr.f32.mxu0 0.0
    %550 = vmatmul.mubr.f32.gmra.mxu0 %v454
    %v551 = vpop.f32.mrf.mxu0
    %v552 = vadd.f32 %v438, %v551
    %v553 = vpop.f32.mrf.mxu0
    %554 = vmatprep.mubr.f32.mxu0 0.0
    %555 = vmatmul.mubr.f32.gmra.mxu0 %v457
    %v556 = vpop.f32.mrf.mxu0
    %v557 = vadd.f32 %v438, %v556
    %v558 = vpop.f32.mrf.mxu0
    %559 = vmatprep.mubr.f32.mxu0 0.0
    %560 = vmatmul.mubr.f32.gmra.mxu0 %v460
    %v561 = vpop.f32.mrf.mxu0
    %v562 = vadd.f32 %v438, %v561
    %v563 = vpop.f32.mrf.mxu0
    %564 = vmatprep.mubr.f32.mxu0 0.0
    %565 = vmatmul.mubr.f32.gmra.mxu0 %v463
    %v566 = vpop.f32.mrf.mxu0
    %v567 = vadd.f32 %v438, %v566
    %v568 = vpop.f32.mrf.mxu0
    %569 = vdwg.mxu0
    %v570 = vmax.f32 %v532, 0.0
    %v571 = vmax.f32 %v537, 0.0
    %v572 = vmax.f32 %v542, 0.0
    %v573 = vmax.f32 %v547, 0.0
    %v574 = vmax.f32 %v552, 0.0
    %v575 = vmax.f32 %v557, 0.0
    %v576 = vmax.f32 %v562, 0.0
    %v577 = vmax.f32 %v567, 0.0
    %v578 = vld [vmem:[%s7] sm:$0x1]
    %v579 = vld [vmem:[#allocation2] sm:$0x1]
    %v581 = vlaneseq
    %v582 = vshrl.u32 %v581, 7
    %v583 = vsub.s32 0, %v582
    %v584 = vrot.slane %v578, %v583
    %v586 = vmul.f32 %v570, %v584
    %v587 = vmul.f32 %v571, %v584
    %v588 = vmul.f32 %v572, %v584
    %v589 = vmul.f32 %v573, %v584
    %v590 = vmul.f32 %v574, %v584
    %v591 = vmul.f32 %v575, %v584
    %v592 = vmul.f32 %v576, %v584
    %v593 = vmul.f32 %v577, %v584
    %v594 = vsel %vm440, %v586, 0.0
    %595 = vadd.xlane.f32.xlu0 %v594
    %v596 = vpop.xlane.xlu0 %595
    %v597 = vsel %vm440, %v587, 0.0
    %598 = vadd.xlane.f32.xlu0 %v597
    %v599 = vpop.xlane.xlu0 %598
    %v600 = vsel %vm440, %v588, 0.0
    %601 = vadd.xlane.f32.xlu0 %v600
    %v602 = vpop.xlane.xlu0 %601
    %v603 = vsel %vm440, %v589, 0.0
    %604 = vadd.xlane.f32.xlu0 %v603
    %v605 = vpop.xlane.xlu0 %604
    %v606 = vsel %vm440, %v590, 0.0
    %607 = vadd.xlane.f32.xlu0 %v606
    %v608 = vpop.xlane.xlu0 %607
    %v609 = vsel %vm440, %v591, 0.0
    %610 = vadd.xlane.f32.xlu0 %v609
    %v611 = vpop.xlane.xlu0 %610
    %v612 = vsel %vm440, %v592, 0.0
    %613 = vadd.xlane.f32.xlu0 %v612
    %v614 = vpop.xlane.xlu0 %613
    %v615 = vsel %vm440, %v593, 0.0
    %616 = vadd.xlane.f32.xlu0 %v615
    %v617 = vpop.xlane.xlu0 %616
    %v619 = vlaneseq
    %v620 = vshrl.u32 %v619, 7
    %v621 = vsub.s32 0, %v620
    %v622 = vrot.slane %v579, %v621
    %v624 = vadd.f32 %v596, %v622
    %v625 = vadd.f32 %v599, %v622
    %v626 = vadd.f32 %v602, %v622
    %v627 = vadd.f32 %v605, %v622
    %v628 = vadd.f32 %v608, %v622
    %v629 = vadd.f32 %v611, %v622
    %v630 = vadd.f32 %v614, %v622
    %v631 = vadd.f32 %v617, %v622
    %v632 = vsub.f32 0.0, %v624
    %v633 = vsub.f32 0.0, %v625
    %v634 = vsub.f32 0.0, %v626
    %v635 = vsub.f32 0.0, %v627
    %v636 = vsub.f32 0.0, %v628
    %v637 = vsub.f32 0.0, %v629
    %v638 = vsub.f32 0.0, %v630
    %v639 = vsub.f32 0.0, %v631
    %vm640 = vcmask 7168
    %v641 = vsel %vm640, %v632, -inf
    %v642 = vrot.slane %v641, 4
    %v643 = vmax.f32 %v641, %v642
    %v644 = vrot.slane %v643, 2
    %v645 = vmax.f32 %v643, %v644
    %v646 = vrot.slane %v645, 1
    %v647 = vmax.f32 %v645, %v646
    %v648 = vsel %vm640, %v633, -inf
    %v649 = vrot.slane %v648, 4
    %v650 = vmax.f32 %v648, %v649
    %v651 = vrot.slane %v650, 2
    %v652 = vmax.f32 %v650, %v651
    %v653 = vrot.slane %v652, 1
    %v654 = vmax.f32 %v652, %v653
    %v655 = vsel %vm640, %v634, -inf
    %v656 = vrot.slane %v655, 4
    %v657 = vmax.f32 %v655, %v656
    %v658 = vrot.slane %v657, 2
    %v659 = vmax.f32 %v657, %v658
    %v660 = vrot.slane %v659, 1
    %v661 = vmax.f32 %v659, %v660
    %v662 = vsel %vm640, %v635, -inf
    %v663 = vrot.slane %v662, 4
    %v664 = vmax.f32 %v662, %v663
    %v665 = vrot.slane %v664, 2
    %v666 = vmax.f32 %v664, %v665
    %v667 = vrot.slane %v666, 1
    %v668 = vmax.f32 %v666, %v667
    %v669 = vsel %vm640, %v636, -inf
    %v670 = vrot.slane %v669, 4
    %v671 = vmax.f32 %v669, %v670
    %v672 = vrot.slane %v671, 2
    %v673 = vmax.f32 %v671, %v672
    %v674 = vrot.slane %v673, 1
    %v675 = vmax.f32 %v673, %v674
    %v676 = vsel %vm640, %v637, -inf
    %v677 = vrot.slane %v676, 4
    %v678 = vmax.f32 %v676, %v677
    %v679 = vrot.slane %v678, 2
    %v680 = vmax.f32 %v678, %v679
    %v681 = vrot.slane %v680, 1
    %v682 = vmax.f32 %v680, %v681
    %v683 = vsel %vm640, %v638, -inf
    %v684 = vrot.slane %v683, 4
    %v685 = vmax.f32 %v683, %v684
    %v686 = vrot.slane %v685, 2
    %v687 = vmax.f32 %v685, %v686
    %v688 = vrot.slane %v687, 1
    %v689 = vmax.f32 %v687, %v688
    %v690 = vsel %vm640, %v639, -inf
    %v691 = vrot.slane %v690, 4
    %v692 = vmax.f32 %v690, %v691
    %v693 = vrot.slane %v692, 2
    %v694 = vmax.f32 %v692, %v693
    %v695 = vrot.slane %v694, 1
    %v696 = vmax.f32 %v694, %v695
    %v697 = vsub.f32 %v632, %v647
    %v698 = vsub.f32 %v633, %v654
    %v699 = vsub.f32 %v634, %v661
    %v700 = vsub.f32 %v635, %v668
    %v701 = vsub.f32 %v636, %v675
    %v702 = vsub.f32 %v637, %v682
    %v703 = vsub.f32 %v638, %v689
    %v704 = vsub.f32 %v639, %v696
    %v705 = vmul.f32 %v697, 1.442695
    %v706 = vpow.pop %v705
    %v707 = vmul.f32 %v698, 1.442695
    %v708 = vpow.pop %v707
    %v709 = vmul.f32 %v699, 1.442695
    %v710 = vpow.pop %v709
    %v711 = vmul.f32 %v700, 1.442695
    %v712 = vpow.pop %v711
    %v713 = vmul.f32 %v701, 1.442695
    %v714 = vpow.pop %v713
    %v715 = vmul.f32 %v702, 1.442695
    %v716 = vpow.pop %v715
    %v717 = vmul.f32 %v703, 1.442695
    %v718 = vpow.pop %v717
    %v719 = vmul.f32 %v704, 1.442695
    %v720 = vpow.pop %v719
    %v721 = vsel %vm640, %v706, 0.0
    %v722 = vrot.slane %v721, 4
    %v723 = vadd.f32 %v721, %v722
    %v724 = vrot.slane %v723, 2
    %v725 = vadd.f32 %v723, %v724
    %v726 = vrot.slane %v725, 1
    %v727 = vadd.f32 %v725, %v726
    %v728 = vsel %vm640, %v708, 0.0
    %v729 = vrot.slane %v728, 4
    %v730 = vadd.f32 %v728, %v729
    %v731 = vrot.slane %v730, 2
    %v732 = vadd.f32 %v730, %v731
    %v733 = vrot.slane %v732, 1
    %v734 = vadd.f32 %v732, %v733
    %v735 = vsel %vm640, %v710, 0.0
    %v736 = vrot.slane %v735, 4
    %v737 = vadd.f32 %v735, %v736
    %v738 = vrot.slane %v737, 2
    %v739 = vadd.f32 %v737, %v738
    %v740 = vrot.slane %v739, 1
    %v741 = vadd.f32 %v739, %v740
    %v742 = vsel %vm640, %v712, 0.0
    %v743 = vrot.slane %v742, 4
    %v744 = vadd.f32 %v742, %v743
    %v745 = vrot.slane %v744, 2
    %v746 = vadd.f32 %v744, %v745
    %v747 = vrot.slane %v746, 1
    %v748 = vadd.f32 %v746, %v747
    %v749 = vsel %vm640, %v714, 0.0
    %v750 = vrot.slane %v749, 4
    %v751 = vadd.f32 %v749, %v750
    %v752 = vrot.slane %v751, 2
    %v753 = vadd.f32 %v751, %v752
    %v754 = vrot.slane %v753, 1
    %v755 = vadd.f32 %v753, %v754
    %v756 = vsel %vm640, %v716, 0.0
    %v757 = vrot.slane %v756, 4
    %v758 = vadd.f32 %v756, %v757
    %v759 = vrot.slane %v758, 2
    %v760 = vadd.f32 %v758, %v759
    %v761 = vrot.slane %v760, 1
    %v762 = vadd.f32 %v760, %v761
    %v763 = vsel %vm640, %v718, 0.0
    %v764 = vrot.slane %v763, 4
    %v765 = vadd.f32 %v763, %v764
    %v766 = vrot.slane %v765, 2
    %v767 = vadd.f32 %v765, %v766
    %v768 = vrot.slane %v767, 1
    %v769 = vadd.f32 %v767, %v768
    %v770 = vsel %vm640, %v720, 0.0
    %v771 = vrot.slane %v770, 4
    %v772 = vadd.f32 %v770, %v771
    %v773 = vrot.slane %v772, 2
    %v774 = vadd.f32 %v772, %v773
    %v775 = vrot.slane %v774, 1
    %v776 = vadd.f32 %v774, %v775
    %v777 = vrcp.pop %v727
    %v778 = vrcp.pop %v734
    %v779 = vrcp.pop %v741
    %v780 = vrcp.pop %v748
    %v781 = vrcp.pop %v755
    %v782 = vrcp.pop %v762
    %v783 = vrcp.pop %v769
    %v784 = vrcp.pop %v776
    %v785 = vmul.f32 %v706, %v777
    %v786 = vmul.f32 %v708, %v778
    %v787 = vmul.f32 %v710, %v779
    %v788 = vmul.f32 %v712, %v780
    %v789 = vmul.f32 %v714, %v781
    %v790 = vmul.f32 %v716, %v782
    %v791 = vmul.f32 %v718, %v783
    %v792 = vmul.f32 %v720, %v784
    %793 = vst.msk [vmem:[%s9] sm:$0xff] %vm640, %v785
    %794 = vst.msk [vmem:[%s9 + $0x8] sm:$0xff] %vm640, %v786
    %795 = vst.msk [vmem:[%s9 + $0x10] sm:$0xff] %vm640, %v787
    %796 = vst.msk [vmem:[%s9 + $0x18] sm:$0xff] %vm640, %v788
    %797 = vst.msk [vmem:[%s9 + $0x20] sm:$0xff] %vm640, %v789
    %798 = vst.msk [vmem:[%s9 + $0x28] sm:$0xff] %vm640, %v790
    %799 = vst.msk [vmem:[%s9 + $0x30] sm:$0xff] %vm640, %v791
    %800 = vst.msk [vmem:[%s9 + $0x38] sm:$0xff] %vm640, %v792
    // Predicated region
    $region58: #{tpu_custom_call.1} parent=1 // pred_check
      _
    $region59: #{tpu_custom_call.1} parent=1 // pred_check_branch
      %802 = sbr.rel (0) target = $region61
    $region60: #{tpu_custom_call.1} parent=1 // pred_region
      _
    $region61: #{tpu_custom_call.1} parent=1 // pred_fallthru
      _
    // Predicated region
    $region62: #{tpu_custom_call.1} parent=1 // pred_check
      _
    $region63: #{tpu_custom_call.1} parent=1 // pred_check_branch
      %804 = sbr.rel (0) target = $region65
    $region64: #{tpu_custom_call.1} parent=1 // pred_region
      _
    $region65: #{tpu_custom_call.1} parent=1 // pred_fallthru
      _
    %805 = vsyncpa [#allocation4], 1
    %806 = vsyncpa [#allocation6], 1
    %807 = vsyncpa [#allocation9], 1

</llo_original>
